<compile_context>
chip_gen: v6e
topology: v6e:2x2x1
jax: 0.10.0
libtpu: 0.0.40
codegen_flags: <defaults>
</compile_context>

<pallas_src>
import jax
import jax.numpy as jnp
from jax.experimental import pallas as pl
from jax.experimental.pallas import tpu as pltpu

EMBEDDING_SIZE = 64
NUM_FEATURES = 9  # ESOL node features


def _vmem_spec():
    return pl.BlockSpec(memory_space=pltpu.MemorySpace.VMEM)


# ----------------------------------------------------------------------------
# Fused kernel:
#   h = tanh((A @ X) @ W0 + b0)
#   h = tanh(A @ (h @ Wi) + bi)          i = 1..3
#   hidden = [global_max_pool(h), global_mean_pool(h)]   -> [G, 2C]
# (The tiny [G, 1] linear readout is done outside the kernel, lane-dense-wise.)
# ----------------------------------------------------------------------------
def _gcn_fused_kernel(a_ref, x_ref, mask_ref,
                      w0_ref, b0_ref, w1_ref, b1_ref,
                      w2_ref, b2_ref, w3_ref, b3_ref,
                      hid_ref):
    a = a_ref[...]                                           # [N, N]
    x = x_ref[...]                                           # [N, F]

    # Layer 0: contract A with X first (F=9 << 64).
    ax = jnp.dot(a, x, preferred_element_type=jnp.float32)   # [N, F]
    h = jnp.tanh(
        jnp.dot(ax, w0_ref[...], preferred_element_type=jnp.float32) + b0_ref[...]
    )                                                        # [N, C]

    # Layers 1..3: A @ (h @ W) + b, tanh.  Python loop is static (unrolled).
    for w_ref, b_ref in ((w1_ref, b1_ref), (w2_ref, b2_ref), (w3_ref, b3_ref)):
        hw = jnp.dot(h, w_ref[...], preferred_element_type=jnp.float32)   # [N, C]
        h = jnp.tanh(
            jnp.dot(a, hw, preferred_element_type=jnp.float32) + b_ref[...]
        )

    # ---- pooling ----
    mask = mask_ref[...]                                     # [G, N] one-hot membership
    counts = jnp.maximum(jnp.sum(mask, axis=1, keepdims=True), 1.0)      # [G, 1]
    inv_counts = pl.reciprocal(counts, approx=True)
    mean_p = jnp.dot(mask, h, preferred_element_type=jnp.float32) * inv_counts  # [G, C]

    # Per-graph 2-D masked max: no [G, N, C] intermediate.
    neg = jnp.float32(-1e30)
    num_graphs = mask.shape[0]
    max_rows = []
    for g in range(num_graphs):
        row_mask = mask[g, :][:, None]                       # [N, 1]
        max_rows.append(
            jnp.max(jnp.where(row_mask > 0, h, neg), axis=0, keepdims=True)  # [1, C]
        )
    max_p = jnp.concatenate(max_rows, axis=0)                # [G, C]

    # torch.cat([gmp, gap], dim=1)
    hid_ref[...] = jnp.concatenate([max_p, mean_p], axis=1)  # [G, 2C] (lane-dense: 128)


def gcn_fused(a_hat, x, mask, params):
    g = mask.shape[0]
    c = EMBEDDING_SIZE
    return pl.pallas_call(
        _gcn_fused_kernel,
        out_shape=jax.ShapeDtypeStruct((g, 2 * c), jnp.float32),
        in_specs=[_vmem_spec()] * 11,
        out_specs=_vmem_spec(),
    )(
        a_hat, x, mask,
        params["w0"], params["b0"],
        params["w1"], params["b1"],
        params["w2"], params["b2"],
        params["w3"], params["b3"],
    )


# ----------------------------------------------------------------------------
# Glue: normalized adjacency, parameters, forward
# ----------------------------------------------------------------------------
def build_normalized_adj(edge_index, num_nodes):
    """Dense A_hat = D^-1/2 (A + I) D^-1/2 with A[dst, src] = 1 (GCNConv semantics).

    NOTE: for a static graph batch this should be built once and cached outside
    the hot path (it is O(N^2) HBM traffic on its own).
    """
    src, dst = edge_index[0], edge_index[1]
    adj = jnp.zeros((num_nodes, num_nodes), jnp.float32).at[dst, src].add(1.0)
    adj = adj + jnp.eye(num_nodes, dtype=jnp.float32)  # add_self_loops=True
    deg = jnp.sum(adj, axis=1)
    dinv = jnp.where(deg > 0, 1.0 / jnp.sqrt(deg), 0.0)
    return dinv[:, None] * adj * dinv[None, :]


def init_params(key):
    ks = jax.random.split(key, 10)

    def glorot(k, fan_in, fan_out):
        lim = jnp.sqrt(6.0 / (fan_in + fan_out))
        return jax.random.uniform(k, (fan_in, fan_out), jnp.float32, -lim, lim)

    def bias(k, fan_in, n):
        lim = 1.0 / jnp.sqrt(jnp.float32(fan_in))
        return jax.random.uniform(k, (1, n), jnp.float32, -lim, lim)

    return {
        # initial_conv: GCNConv(num_features, 64)
        "w0": glorot(ks[0], NUM_FEATURES, EMBEDDING_SIZE),
        "b0": bias(ks[1], NUM_FEATURES, EMBEDDING_SIZE),
        # conv1..conv3: GCNConv(64, 64)
        "w1": glorot(ks[2], EMBEDDING_SIZE, EMBEDDING_SIZE),
        "b1": bias(ks[3], EMBEDDING_SIZE, EMBEDDING_SIZE),
        "w2": glorot(ks[4], EMBEDDING_SIZE, EMBEDDING_SIZE),
        "b2": bias(ks[5], EMBEDDING_SIZE, EMBEDDING_SIZE),
        "w3": glorot(ks[6], EMBEDDING_SIZE, EMBEDDING_SIZE),
        "b3": bias(ks[7], EMBEDDING_SIZE, EMBEDDING_SIZE),
        # out: Linear(128, 1) — stored already transposed as [128, 1]
        "w_out": glorot(ks[8], 2 * EMBEDDING_SIZE, 1),
        "b_out": bias(ks[9], 2 * EMBEDDING_SIZE, 1),
    }


def gcn_forward(params, x, edge_index, batch_index, num_graphs):
    n = x.shape[0]
    a_hat = build_normalized_adj(edge_index, n)
    mask = (batch_index[None, :] == jnp.arange(num_graphs)[:, None]).astype(jnp.float32)
    hidden = gcn_fused(a_hat, x, mask, params)               # [G, 2C] from fused kernel
    # Tiny [G, 128] x [128, 1] readout: done in JAX so the kernel output stays
    # lane-dense (last dim 128) instead of a masked [G, 1] store.
    out = jnp.dot(hidden, params["w_out"]) + params["b_out"]
    return out, hidden


gcn_forward_jit = jax.jit(gcn_forward, static_argnums=(4,))


if __name__ == "__main__":
    key = jax.random.PRNGKey(0)
    pkey, xkey = jax.random.split(key)
    params = init_params(pkey)

    # Two small molecule-like graphs: nodes 0..8 -> graph 0, nodes 9..15 -> graph 1.
    num_nodes = 16
    num_graphs = 2
    x = jax.random.normal(xkey, (num_nodes, NUM_FEATURES), jnp.float32)
    batch_index = jnp.array([0] * 9 + [1] * 7, dtype=jnp.int32)

    # Chain edges within each graph, both directions (undirected, no duplicates).
    src_list, dst_list = [], []
    for a, b in [(i, i + 1) for i in range(0, 8)] + [(i, i + 1) for i in range(9, 15)]:
        src_list += [a, b]
        dst_list += [b, a]
    edge_index = jnp.array([src_list, dst_list], dtype=jnp.int32)  # [2, 28]

    out, hidden = gcn_forward_jit(params, x, edge_index, batch_index, num_graphs)
    jax.block_until_ready((out, hidden))
    assert out.shape == (num_graphs, 1)
    assert hidden.shape == (num_graphs, 2 * EMBEDDING_SIZE)
    assert bool(jnp.all(jnp.isfinite(out))) and bool(jnp.all(jnp.isfinite(hidden)))
    print("KERNEL_OK")
</pallas_src>

<mosaic_0001>
module attributes {stable_mosaic.version = 11 : i64} {
  func.func @_gcn_fused_kernel(%arg0: memref<16x16xf32, #tpu.memory_space<vmem>>, %arg1: memref<16x9xf32, #tpu.memory_space<vmem>>, %arg2: memref<2x16xf32, #tpu.memory_space<vmem>>, %arg3: memref<9x64xf32, #tpu.memory_space<vmem>>, %arg4: memref<1x64xf32, #tpu.memory_space<vmem>>, %arg5: memref<64x64xf32, #tpu.memory_space<vmem>>, %arg6: memref<1x64xf32, #tpu.memory_space<vmem>>, %arg7: memref<64x64xf32, #tpu.memory_space<vmem>>, %arg8: memref<1x64xf32, #tpu.memory_space<vmem>>, %arg9: memref<64x64xf32, #tpu.memory_space<vmem>>, %arg10: memref<1x64xf32, #tpu.memory_space<vmem>>, %arg11: memref<2x128xf32, #tpu.memory_space<vmem>>) attributes {dimension_semantics = [], scalar_prefetch = 0 : i64, scratch_operands = 0 : i64, tpu.core_type = #tpu.core_type<tc>} {
    %c0 = arith.constant 0 : index
    %c0_0 = arith.constant 0 : index
    %0 = vector.load %arg0[%c0, %c0_0] : memref<16x16xf32, #tpu.memory_space<vmem>>, vector<16x16xf32>
    %c0_1 = arith.constant 0 : index
    %c0_2 = arith.constant 0 : index
    %1 = vector.load %arg1[%c0_1, %c0_2] : memref<16x9xf32, #tpu.memory_space<vmem>>, vector<16x9xf32>
    %cst = arith.constant dense<0.000000e+00> : vector<16x9xf32>
    %2 = tpu.matmul %0, %1, %cst {dimension_numbers = #tpu.dot_dimension_numbers<[1], [0], [0], [1], [0, 0, 1, 1], [], []>} : vector<16x16xf32>, vector<16x9xf32>, vector<16x9xf32> -> vector<16x9xf32>
    %c0_3 = arith.constant 0 : index
    %c0_4 = arith.constant 0 : index
    %3 = vector.load %arg3[%c0_3, %c0_4] : memref<9x64xf32, #tpu.memory_space<vmem>>, vector<9x64xf32>
    %cst_5 = arith.constant dense<0.000000e+00> : vector<16x64xf32>
    %4 = tpu.matmul %2, %3, %cst_5 {dimension_numbers = #tpu.dot_dimension_numbers<[1], [0], [0], [1], [0, 0, 1, 1], [], []>} : vector<16x9xf32>, vector<9x64xf32>, vector<16x64xf32> -> vector<16x64xf32>
    %c0_6 = arith.constant 0 : index
    %c0_7 = arith.constant 0 : index
    %5 = vector.load %arg4[%c0_6, %c0_7] : memref<1x64xf32, #tpu.memory_space<vmem>>, vector<1x64xf32>
    %6 = vector.broadcast %5 : vector<1x64xf32> to vector<16x64xf32>
    %7 = arith.addf %4, %6 : vector<16x64xf32>
    %8 = math.tanh %7 : vector<16x64xf32>
    %c0_8 = arith.constant 0 : index
    %c0_9 = arith.constant 0 : index
    %9 = vector.load %arg5[%c0_8, %c0_9] : memref<64x64xf32, #tpu.memory_space<vmem>>, vector<64x64xf32>
    %cst_10 = arith.constant dense<0.000000e+00> : vector<16x64xf32>
    %10 = tpu.matmul %8, %9, %cst_10 {dimension_numbers = #tpu.dot_dimension_numbers<[1], [0], [0], [1], [0, 0, 1, 1], [], []>} : vector<16x64xf32>, vector<64x64xf32>, vector<16x64xf32> -> vector<16x64xf32>
    %cst_11 = arith.constant dense<0.000000e+00> : vector<16x64xf32>
    %11 = tpu.matmul %0, %10, %cst_11 {dimension_numbers = #tpu.dot_dimension_numbers<[1], [0], [0], [1], [0, 0, 1, 1], [], []>} : vector<16x16xf32>, vector<16x64xf32>, vector<16x64xf32> -> vector<16x64xf32>
    %c0_12 = arith.constant 0 : index
    %c0_13 = arith.constant 0 : index
    %12 = vector.load %arg6[%c0_12, %c0_13] : memref<1x64xf32, #tpu.memory_space<vmem>>, vector<1x64xf32>
    %13 = vector.broadcast %12 : vector<1x64xf32> to vector<16x64xf32>
    %14 = arith.addf %11, %13 : vector<16x64xf32>
    %15 = math.tanh %14 : vector<16x64xf32>
    %c0_14 = arith.constant 0 : index
    %c0_15 = arith.constant 0 : index
    %16 = vector.load %arg7[%c0_14, %c0_15] : memref<64x64xf32, #tpu.memory_space<vmem>>, vector<64x64xf32>
    %cst_16 = arith.constant dense<0.000000e+00> : vector<16x64xf32>
    %17 = tpu.matmul %15, %16, %cst_16 {dimension_numbers = #tpu.dot_dimension_numbers<[1], [0], [0], [1], [0, 0, 1, 1], [], []>} : vector<16x64xf32>, vector<64x64xf32>, vector<16x64xf32> -> vector<16x64xf32>
    %cst_17 = arith.constant dense<0.000000e+00> : vector<16x64xf32>
    %18 = tpu.matmul %0, %17, %cst_17 {dimension_numbers = #tpu.dot_dimension_numbers<[1], [0], [0], [1], [0, 0, 1, 1], [], []>} : vector<16x16xf32>, vector<16x64xf32>, vector<16x64xf32> -> vector<16x64xf32>
    %c0_18 = arith.constant 0 : index
    %c0_19 = arith.constant 0 : index
    %19 = vector.load %arg8[%c0_18, %c0_19] : memref<1x64xf32, #tpu.memory_space<vmem>>, vector<1x64xf32>
    %20 = vector.broadcast %19 : vector<1x64xf32> to vector<16x64xf32>
    %21 = arith.addf %18, %20 : vector<16x64xf32>
    %22 = math.tanh %21 : vector<16x64xf32>
    %c0_20 = arith.constant 0 : index
    %c0_21 = arith.constant 0 : index
    %23 = vector.load %arg9[%c0_20, %c0_21] : memref<64x64xf32, #tpu.memory_space<vmem>>, vector<64x64xf32>
    %cst_22 = arith.constant dense<0.000000e+00> : vector<16x64xf32>
    %24 = tpu.matmul %22, %23, %cst_22 {dimension_numbers = #tpu.dot_dimension_numbers<[1], [0], [0], [1], [0, 0, 1, 1], [], []>} : vector<16x64xf32>, vector<64x64xf32>, vector<16x64xf32> -> vector<16x64xf32>
    %cst_23 = arith.constant dense<0.000000e+00> : vector<16x64xf32>
    %25 = tpu.matmul %0, %24, %cst_23 {dimension_numbers = #tpu.dot_dimension_numbers<[1], [0], [0], [1], [0, 0, 1, 1], [], []>} : vector<16x16xf32>, vector<16x64xf32>, vector<16x64xf32> -> vector<16x64xf32>
    %c0_24 = arith.constant 0 : index
    %c0_25 = arith.constant 0 : index
    %26 = vector.load %arg10[%c0_24, %c0_25] : memref<1x64xf32, #tpu.memory_space<vmem>>, vector<1x64xf32>
    %27 = vector.broadcast %26 : vector<1x64xf32> to vector<16x64xf32>
    %28 = arith.addf %25, %27 : vector<16x64xf32>
    %29 = math.tanh %28 : vector<16x64xf32>
    %c0_26 = arith.constant 0 : index
    %c0_27 = arith.constant 0 : index
    %30 = vector.load %arg2[%c0_26, %c0_27] : memref<2x16xf32, #tpu.memory_space<vmem>>, vector<2x16xf32>
    %cst_28 = arith.constant dense<0.000000e+00> : vector<2xf32>
    %31 = vector.multi_reduction <add>, %30, %cst_28 [1] : vector<2x16xf32> to vector<2xf32>
    %32 = vector.shape_cast %31 : vector<2xf32> to vector<2x1xf32>
    %cst_29 = arith.constant 1.000000e+00 : f32
    %33 = vector.broadcast %cst_29 : f32 to vector<2x1xf32>
    %34 = arith.maximumf %32, %33 : vector<2x1xf32>
    %35 = tpu.reciprocal %34 {approx = true} : vector<2x1xf32> -> vector<2x1xf32>
    %cst_30 = arith.constant dense<0.000000e+00> : vector<2x64xf32>
    %36 = tpu.matmul %30, %29, %cst_30 {dimension_numbers = #tpu.dot_dimension_numbers<[1], [0], [0], [1], [0, 0, 1, 1], [], []>} : vector<2x16xf32>, vector<16x64xf32>, vector<2x64xf32> -> vector<2x64xf32>
    %37 = vector.broadcast %35 : vector<2x1xf32> to vector<2x64xf32>
    %38 = arith.mulf %36, %37 : vector<2x64xf32>
    %39 = vector.extract_strided_slice %30 {offsets = [0, 0], sizes = [1, 16], strides = [1, 1]} : vector<2x16xf32> to vector<1x16xf32>
    %40 = vector.shape_cast %39 : vector<1x16xf32> to vector<16xf32>
    %41 = vector.shape_cast %40 : vector<16xf32> to vector<16x1xf32>
    %cst_31 = arith.constant 0.000000e+00 : f32
    %42 = vector.broadcast %cst_31 : f32 to vector<16x1xf32>
    %43 = arith.cmpf ogt, %41, %42 : vector<16x1xf32>
    %cst_32 = arith.constant -1.000000e+30 : f32
    %44 = vector.shape_cast %43 : vector<16x1xi1> to vector<16x1xi1>
    %45 = vector.broadcast %44 : vector<16x1xi1> to vector<16x64xi1>
    %46 = vector.broadcast %cst_32 : f32 to vector<16x64xf32>
    %47 = arith.select %45, %29, %46 : vector<16x64xi1>, vector<16x64xf32>
    %cst_33 = arith.constant dense<0xFF800000> : vector<64xf32>
    %48 = vector.multi_reduction <maximumf>, %47, %cst_33 [0] : vector<16x64xf32> to vector<64xf32>
    %49 = vector.shape_cast %48 : vector<64xf32> to vector<1x64xf32>
    %50 = vector.extract_strided_slice %30 {offsets = [1, 0], sizes = [1, 16], strides = [1, 1]} : vector<2x16xf32> to vector<1x16xf32>
    %51 = vector.shape_cast %50 : vector<1x16xf32> to vector<16xf32>
    %52 = vector.shape_cast %51 : vector<16xf32> to vector<16x1xf32>
    %cst_34 = arith.constant 0.000000e+00 : f32
    %53 = vector.broadcast %cst_34 : f32 to vector<16x1xf32>
    %54 = arith.cmpf ogt, %52, %53 : vector<16x1xf32>
    %cst_35 = arith.constant -1.000000e+30 : f32
    %55 = vector.shape_cast %54 : vector<16x1xi1> to vector<16x1xi1>
    %56 = vector.broadcast %55 : vector<16x1xi1> to vector<16x64xi1>
    %57 = vector.broadcast %cst_35 : f32 to vector<16x64xf32>
    %58 = arith.select %56, %29, %57 : vector<16x64xi1>, vector<16x64xf32>
    %cst_36 = arith.constant dense<0xFF800000> : vector<64xf32>
    %59 = vector.multi_reduction <maximumf>, %58, %cst_36 [0] : vector<16x64xf32> to vector<64xf32>
    %60 = vector.shape_cast %59 : vector<64xf32> to vector<1x64xf32>
    %61 = tpu.concatenate %49, %60 in 0 : vector<1x64xf32>, vector<1x64xf32> -> vector<2x64xf32>
    %62 = tpu.concatenate %61, %38 in 1 : vector<2x64xf32>, vector<2x64xf32> -> vector<2x128xf32>
    %c0_37 = arith.constant 0 : index
    %c0_38 = arith.constant 0 : index
    %63 = vector.load %arg11[%c0_37, %c0_38] : memref<2x128xf32, #tpu.memory_space<vmem>>, vector<2x128xf32>
    tpu.vector_store %arg11[%c0_37, %c0_38], %62 {strides = array<i32>} : memref<2x128xf32, #tpu.memory_space<vmem>>, vector<2x128xf32>,
    return
  }
}

</mosaic_0001>

<llo_original>
// kernel: gcn_forward.1
$region0: #{gcn_forward.1}
  #allocation0 [shape = 'u32[]', space=smem, size = 0x4, offset = 0x4, fixed_abs, tag = 'smem constant byte address 0x4 - core index']
  #allocation1 [shape = 'u32[144,128]{1,0:T(1,128)}', space=vmem, size = 0x12000, scoped, tag = 'internal scratch']
  %s0 = inlined_call_operand.vmem [shape: f32[16,16], index: 0, kind: input, shape index: {}]
  %s1 = inlined_call_operand.vmem [shape: f32[16,9], index: 1, kind: input, shape index: {}]
  %s2 = inlined_call_operand.vmem [shape: f32[2,16], index: 2, kind: input, shape index: {}]
  %s3 = inlined_call_operand.vmem [shape: f32[9,64], index: 3, kind: input, shape index: {}]
  %s4 = inlined_call_operand.vmem [shape: f32[1,64], index: 4, kind: input, shape index: {}]
  %s5 = inlined_call_operand.vmem [shape: f32[64,64], index: 5, kind: input, shape index: {}]
  %s6 = inlined_call_operand.vmem [shape: f32[1,64], index: 6, kind: input, shape index: {}]
  %s7 = inlined_call_operand.vmem [shape: f32[64,64], index: 7, kind: input, shape index: {}]
  %s8 = inlined_call_operand.vmem [shape: f32[1,64], index: 8, kind: input, shape index: {}]
  %s9 = inlined_call_operand.vmem [shape: f32[64,64], index: 9, kind: input, shape index: {}]
  %s10 = inlined_call_operand.vmem [shape: f32[1,64], index: 10, kind: input, shape index: {}]
  %s11 = inlined_call_operand.vmem [shape: f32[2,128], index: 11, kind: output, shape index: {}]
  %s12 = sld [smem:[#allocation0]]
  $region54: #{gcn_forward.1} parent=0
    _
  %s14 = ssub.s32 1, %s12
  %s15 = scalar_select 0, %s14, %s12
  // Predicated region
  $region2: #{gcn_forward.1} parent=0 // pred_check
    _
  $region3: #{gcn_forward.1} parent=0 // pred_check_branch
    %17 = sbr.rel (0) target = $region5
  $region4: #{gcn_forward.1} parent=0 // pred_region
    _
  $region5: #{gcn_forward.1} parent=0 // pred_fallthru
    _
  // Predicated region
  $region6: #{gcn_forward.1} parent=0 // pred_check
    _
  $region7: #{gcn_forward.1} parent=0 // pred_check_branch
    %19 = sbr.rel (0) target = $region9
  $region8: #{gcn_forward.1} parent=0 // pred_region
    _
  $region9: #{gcn_forward.1} parent=0 // pred_fallthru
    _
  // Predicated region
  $region10: #{gcn_forward.1} parent=0 // pred_check
    _
  $region11: #{gcn_forward.1} parent=0 // pred_check_branch
    %21 = sbr.rel (0) target = $region13
  $region12: #{gcn_forward.1} parent=0 // pred_region
    _
  $region13: #{gcn_forward.1} parent=0 // pred_fallthru
    _
  // Predicated region
  $region14: #{gcn_forward.1} parent=0 // pred_check
    _
  $region15: #{gcn_forward.1} parent=0 // pred_check_branch
    %23 = sbr.rel (0) target = $region17
  $region16: #{gcn_forward.1} parent=0 // pred_region
    _
  $region17: #{gcn_forward.1} parent=0 // pred_fallthru
    _
  // Predicated region
  $region18: #{gcn_forward.1} parent=0 // pred_check
    _
  $region19: #{gcn_forward.1} parent=0 // pred_check_branch
    %25 = sbr.rel (0) target = $region21
  $region20: #{gcn_forward.1} parent=0 // pred_region
    _
  $region21: #{gcn_forward.1} parent=0 // pred_fallthru
    _
  // Predicated region
  $region22: #{gcn_forward.1} parent=0 // pred_check
    _
  $region23: #{gcn_forward.1} parent=0 // pred_check_branch
    %27 = sbr.rel (0) target = $region25
  $region24: #{gcn_forward.1} parent=0 // pred_region
    _
  $region25: #{gcn_forward.1} parent=0 // pred_fallthru
    _
  // Predicated region
  $region26: #{gcn_forward.1} parent=0 // pred_check
    _
  $region27: #{gcn_forward.1} parent=0 // pred_check_branch
    %29 = sbr.rel (0) target = $region29
  $region28: #{gcn_forward.1} parent=0 // pred_region
    _
  $region29: #{gcn_forward.1} parent=0 // pred_fallthru
    _
  // Predicated region
  $region30: #{gcn_forward.1} parent=0 // pred_check
    _
  $region31: #{gcn_forward.1} parent=0 // pred_check_branch
    %31 = sbr.rel (0) target = $region33
  $region32: #{gcn_forward.1} parent=0 // pred_region
    _
  $region33: #{gcn_forward.1} parent=0 // pred_fallthru
    _
  // Predicated region
  $region34: #{gcn_forward.1} parent=0 // pred_check
    _
  $region35: #{gcn_forward.1} parent=0 // pred_check_branch
    %33 = sbr.rel (0) target = $region37
  $region36: #{gcn_forward.1} parent=0 // pred_region
    _
  $region37: #{gcn_forward.1} parent=0 // pred_fallthru
    _
  // Predicated region
  $region38: #{gcn_forward.1} parent=0 // pred_check
    _
  $region39: #{gcn_forward.1} parent=0 // pred_check_branch
    %35 = sbr.rel (0) target = $region41
  $region40: #{gcn_forward.1} parent=0 // pred_region
    _
  $region41: #{gcn_forward.1} parent=0 // pred_fallthru
    _
  // Predicated region
  $region42: #{gcn_forward.1} parent=0 // pred_check
    _
  $region43: #{gcn_forward.1} parent=0 // pred_check_branch
    %37 = sbr.rel (0) target = $region45
  $region44: #{gcn_forward.1} parent=0 // pred_region
    _
  $region45: #{gcn_forward.1} parent=0 // pred_fallthru
    _
  %v38 = vld [vmem:[%s0] sm:$0xff]
  %v39 = vld [vmem:[%s0 + $0x8] sm:$0xff]
  %v40 = vld [vmem:[%s1] sm:$0xff]
  %v41 = vld [vmem:[%s1 + $0x8] sm:$0xff]
  %vm42 = vcmask 130048
  %v44 = vsel %vm42, %v38, 0
  %v47 = vsel %vm42, %v39, 0
  %49 = vmatprep.subr.mxu0 0.0
  %50 = vmatpush1.msra.mxu0 0.0
  %51 = vmatprep.subr.mxu0 0.0
  %52 = vmatpush1.msra.mxu0 0.0
  %53 = vmatprep.subr.mxu0 0.0
  %54 = vmatpush1.msra.mxu0 0.0
  %55 = vmatprep.subr.mxu0 0.0
  %56 = vmatpush1.msra.mxu0 0.0
  %57 = vmatprep.subr.mxu0 0.0
  %58 = vmatpush1.msra.mxu0 0.0
  %59 = vmatprep.subr.mxu0 0.0
  %60 = vmatpush1.msra.mxu0 0.0
  %61 = vmatprep.subr.mxu0 0.0
  %62 = vmatpush1.msra.mxu0 0.0
  %63 = vmatprep.subr.mxu0 0.0
  %64 = vmatpush1.msra.mxu0 0.0
  %65 = vmatprep.subr.mxu0 0.0
  %66 = vmatpush1.msra.mxu0 0.0
  %67 = vmatprep.subr.mxu0 0.0
  %68 = vmatpush1.msra.mxu0 0.0
  %69 = vmatprep.subr.mxu0 0.0
  %70 = vmatpush1.msra.mxu0 0.0
  %71 = vmatprep.subr.mxu0 0.0
  %72 = vmatpush1.msra.mxu0 0.0
  %73 = vmatprep.subr.mxu0 0.0
  %74 = vmatpush1.msra.mxu0 0.0
  %75 = vmatprep.subr.mxu0 0.0
  %76 = vmatpush1.msra.mxu0 0.0
  %77 = vmatprep.subr.mxu0 0.0
  %78 = vmatpush1.msra.mxu0 %v41
  %79 = vmatprep.subr.mxu0 0.0
  %80 = vmatpush1.msra.mxu0 %v40
  %81 = vmatprep.subr.mxu0 0.0
  %82 = vmatpush2.msra.mxu0 0.0
  %83 = vmatprep.subr.mxu0 0.0
  %84 = vmatpush2.msra.mxu0 0.0
  %85 = vmatprep.subr.mxu0 0.0
  %86 = vmatpush2.msra.mxu0 0.0
  %87 = vmatprep.subr.mxu0 0.0
  %88 = vmatpush2.msra.mxu0 0.0
  %89 = vmatprep.subr.mxu0 0.0
  %90 = vmatpush2.msra.mxu0 0.0
  %91 = vmatprep.subr.mxu0 0.0
  %92 = vmatpush2.msra.mxu0 0.0
  %93 = vmatprep.subr.mxu0 0.0
  %94 = vmatpush2.msra.mxu0 0.0
  %95 = vmatprep.subr.mxu0 0.0
  %96 = vmatpush2.msra.mxu0 0.0
  %97 = vmatprep.subr.mxu0 0.0
  %98 = vmatpush2.msra.mxu0 0.0
  %99 = vmatprep.subr.mxu0 0.0
  %100 = vmatpush2.msra.mxu0 0.0
  %101 = vmatprep.subr.mxu0 0.0
  %102 = vmatpush2.msra.mxu0 0.0
  %103 = vmatprep.subr.mxu0 0.0
  %104 = vmatpush2.msra.mxu0 0.0
  %105 = vmatprep.subr.mxu0 0.0
  %106 = vmatpush2.msra.mxu0 0.0
  %107 = vmatprep.subr.mxu0 0.0
  %108 = vmatpush2.msra.mxu0 0.0
  %109 = vmatprep.subr.mxu0 0.0
  %110 = vmatpush2.msra.mxu0 0.0
  %111 = vmatprep.subr.mxu0 0.0
  %112 = vmatpush2.msra.mxu0 0.0
  %113 = vmatprep.mubr.f32.mxu0 0.0
  %114 = vmatmul.mubr.f32.gmra.mxu0 %v44
  %v115 = vpop.f32.mrf.mxu0
  %v116 = vadd.f32 0.0, %v115
  %v117 = vpop.f32.mrf.mxu0
  %118 = vmatprep.mubr.f32.mxu0 0.0
  %119 = vmatmul.mubr.f32.gmra.mxu0 %v47
  %v120 = vpop.f32.mrf.mxu0
  %v121 = vadd.f32 0.0, %v120
  %v122 = vpop.f32.mrf.mxu0
  %123 = vdwg.mxu0
  %v124 = vld [vmem:[%s3] sm:$0xff]
  %v125 = vld [vmem:[%s3 + $0x8] sm:$0x1]
  %v126 = vld [vmem:[%s4] sm:$0x1]
  %v128 = vlaneseq
  %v129 = vshrl.u32 %v128, 7
  %v130 = vsub.s32 0, %v129
  %v131 = vrot.slane %v126, %v130
  %vm133 = vcmask 72704
  %v135 = vsel %vm133, %v116, 0
  %v138 = vsel %vm133, %v121, 0
  %vm140 = vcmask 1040384
  %v142 = vsel %vm140, %v125, 0
  %144 = vmatprep.subr.mxu0 0.0
  %145 = vmatpush1.msra.mxu0 0.0
  %146 = vmatprep.subr.mxu0 0.0
  %147 = vmatpush1.msra.mxu0 0.0
  %148 = vmatprep.subr.mxu0 0.0
  %149 = vmatpush1.msra.mxu0 0.0
  %150 = vmatprep.subr.mxu0 0.0
  %151 = vmatpush1.msra.mxu0 0.0
  %152 = vmatprep.subr.mxu0 0.0
  %153 = vmatpush1.msra.mxu0 0.0
  %154 = vmatprep.subr.mxu0 0.0
  %155 = vmatpush1.msra.mxu0 0.0
  %156 = vmatprep.subr.mxu0 0.0
  %157 = vmatpush1.msra.mxu0 0.0
  %158 = vmatprep.subr.mxu0 0.0
  %159 = vmatpush1.msra.mxu0 0.0
  %160 = vmatprep.subr.mxu0 0.0
  %161 = vmatpush1.msra.mxu0 0.0
  %162 = vmatprep.subr.mxu0 0.0
  %163 = vmatpush1.msra.mxu0 0.0
  %164 = vmatprep.subr.mxu0 0.0
  %165 = vmatpush1.msra.mxu0 0.0
  %166 = vmatprep.subr.mxu0 0.0
  %167 = vmatpush1.msra.mxu0 0.0
  %168 = vmatprep.subr.mxu0 0.0
  %169 = vmatpush1.msra.mxu0 0.0
  %170 = vmatprep.subr.mxu0 0.0
  %171 = vmatpush1.msra.mxu0 0.0
  %172 = vmatprep.subr.mxu0 0.0
  %173 = vmatpush1.msra.mxu0 %v142
  %174 = vmatprep.subr.mxu0 0.0
  %175 = vmatpush1.msra.mxu0 %v124
  %176 = vmatprep.subr.mxu0 0.0
  %177 = vmatpush2.msra.mxu0 0.0
  %178 = vmatprep.subr.mxu0 0.0
  %179 = vmatpush2.msra.mxu0 0.0
  %180 = vmatprep.subr.mxu0 0.0
  %181 = vmatpush2.msra.mxu0 0.0
  %182 = vmatprep.subr.mxu0 0.0
  %183 = vmatpush2.msra.mxu0 0.0
  %184 = vmatprep.subr.mxu0 0.0
  %185 = vmatpush2.msra.mxu0 0.0
  %186 = vmatprep.subr.mxu0 0.0
  %187 = vmatpush2.msra.mxu0 0.0
  %188 = vmatprep.subr.mxu0 0.0
  %189 = vmatpush2.msra.mxu0 0.0
  %190 = vmatprep.subr.mxu0 0.0
  %191 = vmatpush2.msra.mxu0 0.0
  %192 = vmatprep.subr.mxu0 0.0
  %193 = vmatpush2.msra.mxu0 0.0
  %194 = vmatprep.subr.mxu0 0.0
  %195 = vmatpush2.msra.mxu0 0.0
  %196 = vmatprep.subr.mxu0 0.0
  %197 = vmatpush2.msra.mxu0 0.0
  %198 = vmatprep.subr.mxu0 0.0
  %199 = vmatpush2.msra.mxu0 0.0
  %200 = vmatprep.subr.mxu0 0.0
  %201 = vmatpush2.msra.mxu0 0.0
  %202 = vmatprep.subr.mxu0 0.0
  %203 = vmatpush2.msra.mxu0 0.0
  %204 = vmatprep.subr.mxu0 0.0
  %205 = vmatpush2.msra.mxu0 0.0
  %206 = vmatprep.subr.mxu0 0.0
  %207 = vmatpush2.msra.mxu0 0.0
  %208 = vmatprep.mubr.f32.mxu0 0.0
  %209 = vmatmul.mubr.f32.gmra.mxu0 %v135
  %v210 = vpop.f32.mrf.mxu0
  %v211 = vadd.f32 %v131, %v210
  %v212 = vpop.f32.mrf.mxu0
  %213 = vmatprep.mubr.f32.mxu0 0.0
  %214 = vmatmul.mubr.f32.gmra.mxu0 %v138
  %v215 = vpop.f32.mrf.mxu0
  %v216 = vadd.f32 %v131, %v215
  %v217 = vpop.f32.mrf.mxu0
  %218 = vdwg.mxu0
  %v219 = vtanh.pop %v211
  %v220 = vtanh.pop %v216
  %v221 = vld [vmem:[%s5] sm:$0xff]
  %v222 = vld [vmem:[%s5 + $0x8] sm:$0xff]
  %v223 = vld [vmem:[%s5 + $0x10] sm:$0xff]
  %v224 = vld [vmem:[%s5 + $0x18] sm:$0xff]
  %v225 = vld [vmem:[%s5 + $0x20] sm:$0xff]
  %v226 = vld [vmem:[%s5 + $0x28] sm:$0xff]
  %v227 = vld [vmem:[%s5 + $0x30] sm:$0xff]
  %v228 = vld [vmem:[%s5 + $0x38] sm:$0xff]
  %vm229 = vcmask 523264
  %v231 = vsel %vm229, %v219, 0
  %v234 = vsel %vm229, %v220, 0
  %236 = vmatprep.subr.mxu0 0.0
  %237 = vmatpush1.msra.mxu0 0.0
  %238 = vmatprep.subr.mxu0 0.0
  %239 = vmatpush1.msra.mxu0 0.0
  %240 = vmatprep.subr.mxu0 0.0
  %241 = vmatpush1.msra.mxu0 0.0
  %242 = vmatprep.subr.mxu0 0.0
  %243 = vmatpush1.msra.mxu0 0.0
  %244 = vmatprep.subr.mxu0 0.0
  %245 = vmatpush1.msra.mxu0 0.0
  %246 = vmatprep.subr.mxu0 0.0
  %247 = vmatpush1.msra.mxu0 0.0
  %248 = vmatprep.subr.mxu0 0.0
  %249 = vmatpush1.msra.mxu0 0.0
  %250 = vmatprep.subr.mxu0 0.0
  %251 = vmatpush1.msra.mxu0 0.0
  %252 = vmatprep.subr.mxu0 0.0
  %253 = vmatpush1.msra.mxu0 %v228
  %254 = vmatprep.subr.mxu0 0.0
  %255 = vmatpush1.msra.mxu0 %v227
  %256 = vmatprep.subr.mxu0 0.0
  %257 = vmatpush1.msra.mxu0 %v226
  %258 = vmatprep.subr.mxu0 0.0
  %259 = vmatpush1.msra.mxu0 %v225
  %260 = vmatprep.subr.mxu0 0.0
  %261 = vmatpush1.msra.mxu0 %v224
  %262 = vmatprep.subr.mxu0 0.0
  %263 = vmatpush1.msra.mxu0 %v223
  %264 = vmatprep.subr.mxu0 0.0
  %265 = vmatpush1.msra.mxu0 %v222
  %266 = vmatprep.subr.mxu0 0.0
  %267 = vmatpush1.msra.mxu0 %v221
  %268 = vmatprep.subr.mxu0 0.0
  %269 = vmatpush2.msra.mxu0 0.0
  %270 = vmatprep.subr.mxu0 0.0
  %271 = vmatpush2.msra.mxu0 0.0
  %272 = vmatprep.subr.mxu0 0.0
  %273 = vmatpush2.msra.mxu0 0.0
  %274 = vmatprep.subr.mxu0 0.0
  %275 = vmatpush2.msra.mxu0 0.0
  %276 = vmatprep.subr.mxu0 0.0
  %277 = vmatpush2.msra.mxu0 0.0
  %278 = vmatprep.subr.mxu0 0.0
  %279 = vmatpush2.msra.mxu0 0.0
  %280 = vmatprep.subr.mxu0 0.0
  %281 = vmatpush2.msra.mxu0 0.0
  %282 = vmatprep.subr.mxu0 0.0
  %283 = vmatpush2.msra.mxu0 0.0
  %284 = vmatprep.subr.mxu0 0.0
  %285 = vmatpush2.msra.mxu0 0.0
  %286 = vmatprep.subr.mxu0 0.0
  %287 = vmatpush2.msra.mxu0 0.0
  %288 = vmatprep.subr.mxu0 0.0
  %289 = vmatpush2.msra.mxu0 0.0
  %290 = vmatprep.subr.mxu0 0.0
  %291 = vmatpush2.msra.mxu0 0.0
  %292 = vmatprep.subr.mxu0 0.0
  %293 = vmatpush2.msra.mxu0 0.0
  %294 = vmatprep.subr.mxu0 0.0
  %295 = vmatpush2.msra.mxu0 0.0
  %296 = vmatprep.subr.mxu0 0.0
  %297 = vmatpush2.msra.mxu0 0.0
  %298 = vmatprep.subr.mxu0 0.0
  %299 = vmatpush2.msra.mxu0 0.0
  %300 = vmatprep.mubr.f32.mxu0 0.0
  %301 = vmatmul.mubr.f32.gmra.mxu0 %v231
  %v302 = vpop.f32.mrf.mxu0
  %v303 = vadd.f32 0.0, %v302
  %v304 = vpop.f32.mrf.mxu0
  %305 = vmatprep.mubr.f32.mxu0 0.0
  %306 = vmatmul.mubr.f32.gmra.mxu0 %v234
  %v307 = vpop.f32.mrf.mxu0
  %v308 = vadd.f32 0.0, %v307
  %v309 = vpop.f32.mrf.mxu0
  %310 = vdwg.mxu0
  %v311 = vld [vmem:[%s6] sm:$0x1]
  %v313 = vlaneseq
  %v314 = vshrl.u32 %v313, 7
  %v315 = vsub.s32 0, %v314
  %v316 = vrot.slane %v311, %v315
  %318 = vmatprep.subr.mxu0 0.0
  %319 = vmatpush1.msra.mxu0 0.0
  %320 = vmatprep.subr.mxu0 0.0
  %321 = vmatpush1.msra.mxu0 0.0
  %322 = vmatprep.subr.mxu0 0.0
  %323 = vmatpush1.msra.mxu0 0.0
  %324 = vmatprep.subr.mxu0 0.0
  %325 = vmatpush1.msra.mxu0 0.0
  %326 = vmatprep.subr.mxu0 0.0
  %327 = vmatpush1.msra.mxu0 0.0
  %328 = vmatprep.subr.mxu0 0.0
  %329 = vmatpush1.msra.mxu0 0.0
  %330 = vmatprep.subr.mxu0 0.0
  %331 = vmatpush1.msra.mxu0 0.0
  %332 = vmatprep.subr.mxu0 0.0
  %333 = vmatpush1.msra.mxu0 0.0
  %334 = vmatprep.subr.mxu0 0.0
  %335 = vmatpush1.msra.mxu0 0.0
  %336 = vmatprep.subr.mxu0 0.0
  %337 = vmatpush1.msra.mxu0 0.0
  %338 = vmatprep.subr.mxu0 0.0
  %339 = vmatpush1.msra.mxu0 0.0
  %340 = vmatprep.subr.mxu0 0.0
  %341 = vmatpush1.msra.mxu0 0.0
  %342 = vmatprep.subr.mxu0 0.0
  %343 = vmatpush1.msra.mxu0 0.0
  %344 = vmatprep.subr.mxu0 0.0
  %345 = vmatpush1.msra.mxu0 0.0
  %346 = vmatprep.subr.mxu0 0.0
  %347 = vmatpush1.msra.mxu0 %v308
  %348 = vmatprep.subr.mxu0 0.0
  %349 = vmatpush1.msra.mxu0 %v303
  %350 = vmatprep.subr.mxu0 0.0
  %351 = vmatpush2.msra.mxu0 0.0
  %352 = vmatprep.subr.mxu0 0.0
  %353 = vmatpush2.msra.mxu0 0.0
  %354 = vmatprep.subr.mxu0 0.0
  %355 = vmatpush2.msra.mxu0 0.0
  %356 = vmatprep.subr.mxu0 0.0
  %357 = vmatpush2.msra.mxu0 0.0
  %358 = vmatprep.subr.mxu0 0.0
  %359 = vmatpush2.msra.mxu0 0.0
  %360 = vmatprep.subr.mxu0 0.0
  %361 = vmatpush2.msra.mxu0 0.0
  %362 = vmatprep.subr.mxu0 0.0
  %363 = vmatpush2.msra.mxu0 0.0
  %364 = vmatprep.subr.mxu0 0.0
  %365 = vmatpush2.msra.mxu0 0.0
  %366 = vmatprep.subr.mxu0 0.0
  %367 = vmatpush2.msra.mxu0 0.0
  %368 = vmatprep.subr.mxu0 0.0
  %369 = vmatpush2.msra.mxu0 0.0
  %370 = vmatprep.subr.mxu0 0.0
  %371 = vmatpush2.msra.mxu0 0.0
  %372 = vmatprep.subr.mxu0 0.0
  %373 = vmatpush2.msra.mxu0 0.0
  %374 = vmatprep.subr.mxu0 0.0
  %375 = vmatpush2.msra.mxu0 0.0
  %376 = vmatprep.subr.mxu0 0.0
  %377 = vmatpush2.msra.mxu0 0.0
  %378 = vmatprep.subr.mxu0 0.0
  %379 = vmatpush2.msra.mxu0 0.0
  %380 = vmatprep.subr.mxu0 0.0
  %381 = vmatpush2.msra.mxu0 0.0
  %382 = vmatprep.mubr.f32.mxu0 0.0
  %383 = vmatmul.mubr.f32.gmra.mxu0 %v44
  %v384 = vpop.f32.mrf.mxu0
  %v385 = vadd.f32 %v316, %v384
  %v386 = vpop.f32.mrf.mxu0
  %387 = vmatprep.mubr.f32.mxu0 0.0
  %388 = vmatmul.mubr.f32.gmra.mxu0 %v47
  %v389 = vpop.f32.mrf.mxu0
  %v390 = vadd.f32 %v316, %v389
  %v391 = vpop.f32.mrf.mxu0
  %392 = vdwg.mxu0
  %v393 = vtanh.pop %v385
  %v394 = vtanh.pop %v390
  %v395 = vld [vmem:[%s7] sm:$0xff]
  %v396 = vld [vmem:[%s7 + $0x8] sm:$0xff]
  %v397 = vld [vmem:[%s7 + $0x10] sm:$0xff]
  %v398 = vld [vmem:[%s7 + $0x18] sm:$0xff]
  %v399 = vld [vmem:[%s7 + $0x20] sm:$0xff]
  %v400 = vld [vmem:[%s7 + $0x28] sm:$0xff]
  %v401 = vld [vmem:[%s7 + $0x30] sm:$0xff]
  %v402 = vld [vmem:[%s7 + $0x38] sm:$0xff]
  %v404 = vsel %vm229, %v393, 0
  %v407 = vsel %vm229, %v394, 0
  %409 = vmatprep.subr.mxu0 0.0
  %410 = vmatpush1.msra.mxu0 0.0
  %411 = vmatprep.subr.mxu0 0.0
  %412 = vmatpush1.msra.mxu0 0.0
  %413 = vmatprep.subr.mxu0 0.0
  %414 = vmatpush1.msra.mxu0 0.0
  %415 = vmatprep.subr.mxu0 0.0
  %416 = vmatpush1.msra.mxu0 0.0
  %417 = vmatprep.subr.mxu0 0.0
  %418 = vmatpush1.msra.mxu0 0.0
  %419 = vmatprep.subr.mxu0 0.0
  %420 = vmatpush1.msra.mxu0 0.0
  %421 = vmatprep.subr.mxu0 0.0
  %422 = vmatpush1.msra.mxu0 0.0
  %423 = vmatprep.subr.mxu0 0.0
  %424 = vmatpush1.msra.mxu0 0.0
  %425 = vmatprep.subr.mxu0 0.0
  %426 = vmatpush1.msra.mxu0 %v402
  %427 = vmatprep.subr.mxu0 0.0
  %428 = vmatpush1.msra.mxu0 %v401
  %429 = vmatprep.subr.mxu0 0.0
  %430 = vmatpush1.msra.mxu0 %v400
  %431 = vmatprep.subr.mxu0 0.0
  %432 = vmatpush1.msra.mxu0 %v399
  %433 = vmatprep.subr.mxu0 0.0
  %434 = vmatpush1.msra.mxu0 %v398
  %435 = vmatprep.subr.mxu0 0.0
  %436 = vmatpush1.msra.mxu0 %v397
  %437 = vmatprep.subr.mxu0 0.0
  %438 = vmatpush1.msra.mxu0 %v396
  %439 = vmatprep.subr.mxu0 0.0
  %440 = vmatpush1.msra.mxu0 %v395
  %441 = vmatprep.subr.mxu0 0.0
  %442 = vmatpush2.msra.mxu0 0.0
  %443 = vmatprep.subr.mxu0 0.0
  %444 = vmatpush2.msra.mxu0 0.0
  %445 = vmatprep.subr.mxu0 0.0
  %446 = vmatpush2.msra.mxu0 0.0
  %447 = vmatprep.subr.mxu0 0.0
  %448 = vmatpush2.msra.mxu0 0.0
  %449 = vmatprep.subr.mxu0 0.0
  %450 = vmatpush2.msra.mxu0 0.0
  %451 = vmatprep.subr.mxu0 0.0
  %452 = vmatpush2.msra.mxu0 0.0
  %453 = vmatprep.subr.mxu0 0.0
  %454 = vmatpush2.msra.mxu0 0.0
  %455 = vmatprep.subr.mxu0 0.0
  %456 = vmatpush2.msra.mxu0 0.0
  %457 = vmatprep.subr.mxu0 0.0
  %458 = vmatpush2.msra.mxu0 0.0
  %459 = vmatprep.subr.mxu0 0.0
  %460 = vmatpush2.msra.mxu0 0.0
  %461 = vmatprep.subr.mxu0 0.0
  %462 = vmatpush2.msra.mxu0 0.0
  %463 = vmatprep.subr.mxu0 0.0
  %464 = vmatpush2.msra.mxu0 0.0
  %465 = vmatprep.subr.mxu0 0.0
  %466 = vmatpush2.msra.mxu0 0.0
  %467 = vmatprep.subr.mxu0 0.0
  %468 = vmatpush2.msra.mxu0 0.0
  %469 = vmatprep.subr.mxu0 0.0
  %470 = vmatpush2.msra.mxu0 0.0
  %471 = vmatprep.subr.mxu0 0.0
  %472 = vmatpush2.msra.mxu0 0.0
  %473 = vmatprep.mubr.f32.mxu0 0.0
  %474 = vmatmul.mubr.f32.gmra.mxu0 %v404
  %v475 = vpop.f32.mrf.mxu0
  %v476 = vadd.f32 0.0, %v475
  %v477 = vpop.f32.mrf.mxu0
  %478 = vmatprep.mubr.f32.mxu0 0.0
  %479 = vmatmul.mubr.f32.gmra.mxu0 %v407
  %v480 = vpop.f32.mrf.mxu0
  %v481 = vadd.f32 0.0, %v480
  %v482 = vpop.f32.mrf.mxu0
  %483 = vdwg.mxu0
  %v484 = vld [vmem:[%s8] sm:$0x1]
  %v486 = vlaneseq
  %v487 = vshrl.u32 %v486, 7
  %v488 = vsub.s32 0, %v487
  %v489 = vrot.slane %v484, %v488
  %491 = vmatprep.subr.mxu0 0.0
  %492 = vmatpush1.msra.mxu0 0.0
  %493 = vmatprep.subr.mxu0 0.0
  %494 = vmatpush1.msra.mxu0 0.0
  %495 = vmatprep.subr.mxu0 0.0
  %496 = vmatpush1.msra.mxu0 0.0
  %497 = vmatprep.subr.mxu0 0.0
  %498 = vmatpush1.msra.mxu0 0.0
  %499 = vmatprep.subr.mxu0 0.0
  %500 = vmatpush1.msra.mxu0 0.0
  %501 = vmatprep.subr.mxu0 0.0
  %502 = vmatpush1.msra.mxu0 0.0
  %503 = vmatprep.subr.mxu0 0.0
  %504 = vmatpush1.msra.mxu0 0.0
  %505 = vmatprep.subr.mxu0 0.0
  %506 = vmatpush1.msra.mxu0 0.0
  %507 = vmatprep.subr.mxu0 0.0
  %508 = vmatpush1.msra.mxu0 0.0
  %509 = vmatprep.subr.mxu0 0.0
  %510 = vmatpush1.msra.mxu0 0.0
  %511 = vmatprep.subr.mxu0 0.0
  %512 = vmatpush1.msra.mxu0 0.0
  %513 = vmatprep.subr.mxu0 0.0
  %514 = vmatpush1.msra.mxu0 0.0
  %515 = vmatprep.subr.mxu0 0.0
  %516 = vmatpush1.msra.mxu0 0.0
  %517 = vmatprep.subr.mxu0 0.0
  %518 = vmatpush1.msra.mxu0 0.0
  %519 = vmatprep.subr.mxu0 0.0
  %520 = vmatpush1.msra.mxu0 %v481
  %521 = vmatprep.subr.mxu0 0.0
  %522 = vmatpush1.msra.mxu0 %v476
  %523 = vmatprep.subr.mxu0 0.0
  %524 = vmatpush2.msra.mxu0 0.0
  %525 = vmatprep.subr.mxu0 0.0
  %526 = vmatpush2.msra.mxu0 0.0
  %527 = vmatprep.subr.mxu0 0.0
  %528 = vmatpush2.msra.mxu0 0.0
  %529 = vmatprep.subr.mxu0 0.0
  %530 = vmatpush2.msra.mxu0 0.0
  %531 = vmatprep.subr.mxu0 0.0
  %532 = vmatpush2.msra.mxu0 0.0
  %533 = vmatprep.subr.mxu0 0.0
  %534 = vmatpush2.msra.mxu0 0.0
  %535 = vmatprep.subr.mxu0 0.0
  %536 = vmatpush2.msra.mxu0 0.0
  %537 = vmatprep.subr.mxu0 0.0
  %538 = vmatpush2.msra.mxu0 0.0
  %539 = vmatprep.subr.mxu0 0.0
  %540 = vmatpush2.msra.mxu0 0.0
  %541 = vmatprep.subr.mxu0 0.0
  %542 = vmatpush2.msra.mxu0 0.0
  %543 = vmatprep.subr.mxu0 0.0
  %544 = vmatpush2.msra.mxu0 0.0
  %545 = vmatprep.subr.mxu0 0.0
  %546 = vmatpush2.msra.mxu0 0.0
  %547 = vmatprep.subr.mxu0 0.0
  %548 = vmatpush2.msra.mxu0 0.0
  %549 = vmatprep.subr.mxu0 0.0
  %550 = vmatpush2.msra.mxu0 0.0
  %551 = vmatprep.subr.mxu0 0.0
  %552 = vmatpush2.msra.mxu0 0.0
  %553 = vmatprep.subr.mxu0 0.0
  %554 = vmatpush2.msra.mxu0 0.0
  %555 = vmatprep.mubr.f32.mxu0 0.0
  %556 = vmatmul.mubr.f32.gmra.mxu0 %v44
  %v557 = vpop.f32.mrf.mxu0
  %v558 = vadd.f32 %v489, %v557
  %v559 = vpop.f32.mrf.mxu0
  %560 = vmatprep.mubr.f32.mxu0 0.0
  %561 = vmatmul.mubr.f32.gmra.mxu0 %v47
  %v562 = vpop.f32.mrf.mxu0
  %v563 = vadd.f32 %v489, %v562
  %v564 = vpop.f32.mrf.mxu0
  %565 = vdwg.mxu0
  %v566 = vtanh.pop %v558
  %v567 = vtanh.pop %v563
  %v568 = vld [vmem:[%s9] sm:$0xff]
  %v569 = vld [vmem:[%s9 + $0x8] sm:$0xff]
  %v570 = vld [vmem:[%s9 + $0x10] sm:$0xff]
  %v571 = vld [vmem:[%s9 + $0x18] sm:$0xff]
  %v572 = vld [vmem:[%s9 + $0x20] sm:$0xff]
  %v573 = vld [vmem:[%s9 + $0x28] sm:$0xff]
  %v574 = vld [vmem:[%s9 + $0x30] sm:$0xff]
  %v575 = vld [vmem:[%s9 + $0x38] sm:$0xff]
  %v577 = vsel %vm229, %v566, 0
  %v580 = vsel %vm229, %v567, 0
  %582 = vmatprep.subr.mxu0 0.0
  %583 = vmatpush1.msra.mxu0 0.0
  %584 = vmatprep.subr.mxu0 0.0
  %585 = vmatpush1.msra.mxu0 0.0
  %586 = vmatprep.subr.mxu0 0.0
  %587 = vmatpush1.msra.mxu0 0.0
  %588 = vmatprep.subr.mxu0 0.0
  %589 = vmatpush1.msra.mxu0 0.0
  %590 = vmatprep.subr.mxu0 0.0
  %591 = vmatpush1.msra.mxu0 0.0
  %592 = vmatprep.subr.mxu0 0.0
  %593 = vmatpush1.msra.mxu0 0.0
  %594 = vmatprep.subr.mxu0 0.0
  %595 = vmatpush1.msra.mxu0 0.0
  %596 = vmatprep.subr.mxu0 0.0
  %597 = vmatpush1.msra.mxu0 0.0
  %598 = vmatprep.subr.mxu0 0.0
  %599 = vmatpush1.msra.mxu0 %v575
  %600 = vmatprep.subr.mxu0 0.0
  %601 = vmatpush1.msra.mxu0 %v574
  %602 = vmatprep.subr.mxu0 0.0
  %603 = vmatpush1.msra.mxu0 %v573
  %604 = vmatprep.subr.mxu0 0.0
  %605 = vmatpush1.msra.mxu0 %v572
  %606 = vmatprep.subr.mxu0 0.0
  %607 = vmatpush1.msra.mxu0 %v571
  %608 = vmatprep.subr.mxu0 0.0
  %609 = vmatpush1.msra.mxu0 %v570
  %610 = vmatprep.subr.mxu0 0.0
  %611 = vmatpush1.msra.mxu0 %v569
  %612 = vmatprep.subr.mxu0 0.0
  %613 = vmatpush1.msra.mxu0 %v568
  %614 = vmatprep.subr.mxu0 0.0
  %615 = vmatpush2.msra.mxu0 0.0
  %616 = vmatprep.subr.mxu0 0.0
  %617 = vmatpush2.msra.mxu0 0.0
  %618 = vmatprep.subr.mxu0 0.0
  %619 = vmatpush2.msra.mxu0 0.0
  %620 = vmatprep.subr.mxu0 0.0
  %621 = vmatpush2.msra.mxu0 0.0
  %622 = vmatprep.subr.mxu0 0.0
  %623 = vmatpush2.msra.mxu0 0.0
  %624 = vmatprep.subr.mxu0 0.0
  %625 = vmatpush2.msra.mxu0 0.0
  %626 = vmatprep.subr.mxu0 0.0
  %627 = vmatpush2.msra.mxu0 0.0
  %628 = vmatprep.subr.mxu0 0.0
  %629 = vmatpush2.msra.mxu0 0.0
  %630 = vmatprep.subr.mxu0 0.0
  %631 = vmatpush2.msra.mxu0 0.0
  %632 = vmatprep.subr.mxu0 0.0
  %633 = vmatpush2.msra.mxu0 0.0
  %634 = vmatprep.subr.mxu0 0.0
  %635 = vmatpush2.msra.mxu0 0.0
  %636 = vmatprep.subr.mxu0 0.0
  %637 = vmatpush2.msra.mxu0 0.0
  %638 = vmatprep.subr.mxu0 0.0
  %639 = vmatpush2.msra.mxu0 0.0
  %640 = vmatprep.subr.mxu0 0.0
  %641 = vmatpush2.msra.mxu0 0.0
  %642 = vmatprep.subr.mxu0 0.0
  %643 = vmatpush2.msra.mxu0 0.0
  %644 = vmatprep.subr.mxu0 0.0
  %645 = vmatpush2.msra.mxu0 0.0
  %646 = vmatprep.mubr.f32.mxu0 0.0
  %647 = vmatmul.mubr.f32.gmra.mxu0 %v577
  %v648 = vpop.f32.mrf.mxu0
  %v649 = vadd.f32 0.0, %v648
  %v650 = vpop.f32.mrf.mxu0
  %651 = vmatprep.mubr.f32.mxu0 0.0
  %652 = vmatmul.mubr.f32.gmra.mxu0 %v580
  %v653 = vpop.f32.mrf.mxu0
  %v654 = vadd.f32 0.0, %v653
  %v655 = vpop.f32.mrf.mxu0
  %656 = vdwg.mxu0
  %v657 = vld [vmem:[%s10] sm:$0x1]
  %v659 = vlaneseq
  %v660 = vshrl.u32 %v659, 7
  %v661 = vsub.s32 0, %v660
  %v662 = vrot.slane %v657, %v661
  %664 = vmatprep.subr.mxu0 0.0
  %665 = vmatpush1.msra.mxu0 0.0
  %666 = vmatprep.subr.mxu0 0.0
  %667 = vmatpush1.msra.mxu0 0.0
  %668 = vmatprep.subr.mxu0 0.0
  %669 = vmatpush1.msra.mxu0 0.0
  %670 = vmatprep.subr.mxu0 0.0
  %671 = vmatpush1.msra.mxu0 0.0
  %672 = vmatprep.subr.mxu0 0.0
  %673 = vmatpush1.msra.mxu0 0.0
  %674 = vmatprep.subr.mxu0 0.0
  %675 = vmatpush1.msra.mxu0 0.0
  %676 = vmatprep.subr.mxu0 0.0
  %677 = vmatpush1.msra.mxu0 0.0
  %678 = vmatprep.subr.mxu0 0.0
  %679 = vmatpush1.msra.mxu0 0.0
  %680 = vmatprep.subr.mxu0 0.0
  %681 = vmatpush1.msra.mxu0 0.0
  %682 = vmatprep.subr.mxu0 0.0
  %683 = vmatpush1.msra.mxu0 0.0
  %684 = vmatprep.subr.mxu0 0.0
  %685 = vmatpush1.msra.mxu0 0.0
  %686 = vmatprep.subr.mxu0 0.0
  %687 = vmatpush1.msra.mxu0 0.0
  %688 = vmatprep.subr.mxu0 0.0
  %689 = vmatpush1.msra.mxu0 0.0
  %690 = vmatprep.subr.mxu0 0.0
  %691 = vmatpush1.msra.mxu0 0.0
  %692 = vmatprep.subr.mxu0 0.0
  %693 = vmatpush1.msra.mxu0 %v654
  %694 = vmatprep.subr.mxu0 0.0
  %695 = vmatpush1.msra.mxu0 %v649
  %696 = vmatprep.subr.mxu0 0.0
  %697 = vmatpush2.msra.mxu0 0.0
  %698 = vmatprep.subr.mxu0 0.0
  %699 = vmatpush2.msra.mxu0 0.0
  %700 = vmatprep.subr.mxu0 0.0
  %701 = vmatpush2.msra.mxu0 0.0
  %702 = vmatprep.subr.mxu0 0.0
  %703 = vmatpush2.msra.mxu0 0.0
  %704 = vmatprep.subr.mxu0 0.0
  %705 = vmatpush2.msra.mxu0 0.0
  %706 = vmatprep.subr.mxu0 0.0
  %707 = vmatpush2.msra.mxu0 0.0
  %708 = vmatprep.subr.mxu0 0.0
  %709 = vmatpush2.msra.mxu0 0.0
  %710 = vmatprep.subr.mxu0 0.0
  %711 = vmatpush2.msra.mxu0 0.0
  %712 = vmatprep.subr.mxu0 0.0
  %713 = vmatpush2.msra.mxu0 0.0
  %714 = vmatprep.subr.mxu0 0.0
  %715 = vmatpush2.msra.mxu0 0.0
  %716 = vmatprep.subr.mxu0 0.0
  %717 = vmatpush2.msra.mxu0 0.0
  %718 = vmatprep.subr.mxu0 0.0
  %719 = vmatpush2.msra.mxu0 0.0
  %720 = vmatprep.subr.mxu0 0.0
  %721 = vmatpush2.msra.mxu0 0.0
  %722 = vmatprep.subr.mxu0 0.0
  %723 = vmatpush2.msra.mxu0 0.0
  %724 = vmatprep.subr.mxu0 0.0
  %725 = vmatpush2.msra.mxu0 0.0
  %726 = vmatprep.subr.mxu0 0.0
  %727 = vmatpush2.msra.mxu0 0.0
  %728 = vmatprep.mubr.f32.mxu0 0.0
  %729 = vmatmul.mubr.f32.gmra.mxu0 %v44
  %v730 = vpop.f32.mrf.mxu0
  %v731 = vadd.f32 %v662, %v730
  %v732 = vpop.f32.mrf.mxu0
  %733 = vmatprep.mubr.f32.mxu0 0.0
  %734 = vmatmul.mubr.f32.gmra.mxu0 %v47
  %v735 = vpop.f32.mrf.mxu0
  %v736 = vadd.f32 %v662, %v735
  %v737 = vpop.f32.mrf.mxu0
  %738 = vdwg.mxu0
  %v739 = vtanh.pop %v731
  %v740 = vtanh.pop %v736
  %v741 = vld [vmem:[%s2] sm:$0x3]
  %vm742 = vcmask 123904
  %v743 = vsel %vm742, %v741, 0.0
  %744 = vadd.xlane.f32.xlu0 %v743
  %v745 = vpop.xlane.xlu0 %744
  %v746 = vmax.f32 %v745, 1.0
  %v747 = vrcp.pop %v746
  %v749 = vsel %vm42, %v741, 0
  %751 = vmatprep.subr.mxu0 0.0
  %752 = vmatpush1.msra.mxu0 0.0
  %753 = vmatprep.subr.mxu0 0.0
  %754 = vmatpush1.msra.mxu0 0.0
  %755 = vmatprep.subr.mxu0 0.0
  %756 = vmatpush1.msra.mxu0 0.0
  %757 = vmatprep.subr.mxu0 0.0
  %758 = vmatpush1.msra.mxu0 0.0
  %759 = vmatprep.subr.mxu0 0.0
  %760 = vmatpush1.msra.mxu0 0.0
  %761 = vmatprep.subr.mxu0 0.0
  %762 = vmatpush1.msra.mxu0 0.0
  %763 = vmatprep.subr.mxu0 0.0
  %764 = vmatpush1.msra.mxu0 0.0
  %765 = vmatprep.subr.mxu0 0.0
  %766 = vmatpush1.msra.mxu0 0.0
  %767 = vmatprep.subr.mxu0 0.0
  %768 = vmatpush1.msra.mxu0 0.0
  %769 = vmatprep.subr.mxu0 0.0
  %770 = vmatpush1.msra.mxu0 0.0
  %771 = vmatprep.subr.mxu0 0.0
  %772 = vmatpush1.msra.mxu0 0.0
  %773 = vmatprep.subr.mxu0 0.0
  %774 = vmatpush1.msra.mxu0 0.0
  %775 = vmatprep.subr.mxu0 0.0
  %776 = vmatpush1.msra.mxu0 0.0
  %777 = vmatprep.subr.mxu0 0.0
  %778 = vmatpush1.msra.mxu0 0.0
  %779 = vmatprep.subr.mxu0 0.0
  %780 = vmatpush1.msra.mxu0 %v740
  %781 = vmatprep.subr.mxu0 0.0
  %782 = vmatpush1.msra.mxu0 %v739
  %783 = vmatprep.subr.mxu0 0.0
  %784 = vmatpush2.msra.mxu0 0.0
  %785 = vmatprep.subr.mxu0 0.0
  %786 = vmatpush2.msra.mxu0 0.0
  %787 = vmatprep.subr.mxu0 0.0
  %788 = vmatpush2.msra.mxu0 0.0
  %789 = vmatprep.subr.mxu0 0.0
  %790 = vmatpush2.msra.mxu0 0.0
  %791 = vmatprep.subr.mxu0 0.0
  %792 = vmatpush2.msra.mxu0 0.0
  %793 = vmatprep.subr.mxu0 0.0
  %794 = vmatpush2.msra.mxu0 0.0
  %795 = vmatprep.subr.mxu0 0.0
  %796 = vmatpush2.msra.mxu0 0.0
  %797 = vmatprep.subr.mxu0 0.0
  %798 = vmatpush2.msra.mxu0 0.0
  %799 = vmatprep.subr.mxu0 0.0
  %800 = vmatpush2.msra.mxu0 0.0
  %801 = vmatprep.subr.mxu0 0.0
  %802 = vmatpush2.msra.mxu0 0.0
  %803 = vmatprep.subr.mxu0 0.0
  %804 = vmatpush2.msra.mxu0 0.0
  %805 = vmatprep.subr.mxu0 0.0
  %806 = vmatpush2.msra.mxu0 0.0
  %807 = vmatprep.subr.mxu0 0.0
  %808 = vmatpush2.msra.mxu0 0.0
  %809 = vmatprep.subr.mxu0 0.0
  %810 = vmatpush2.msra.mxu0 0.0
  %811 = vmatprep.subr.mxu0 0.0
  %812 = vmatpush2.msra.mxu0 0.0
  %813 = vmatprep.subr.mxu0 0.0
  %814 = vmatpush2.msra.mxu0 0.0
  %815 = vmatprep.mubr.f32.mxu0 0.0
  %816 = vmatmul.mubr.f32.gmra.mxu0 %v749
  %v817 = vpop.f32.mrf.mxu0
  %v818 = vadd.f32 0.0, %v817
  %v819 = vpop.f32.mrf.mxu0
  %820 = vdwg.mxu0
  %v821 = vmul.f32 %v818, %v747
  %v822 = vlaneseq
  %v823 = vshrl.u32 %v822, 7
  %v824 = vsub.s32 0, %v823
  %v825 = vrot.slane %v741, %v824
  %827 = vbcast.lane.b32.xlu0 %v825, 256
  %v828 = vpop.permute.xlu0 %827
  %s830 = sor.u32 256, 8
  %831 = vbcast.lane.b32.xlu0 %v825, %s830
  %v832 = vpop.permute.xlu0 %831
  %vm833 = vcmp.gt.f32.partialorder %v828, 0.0
  %vm834 = vcmp.gt.f32.partialorder %v832, 0.0
  %v835 = vsel %vm833, 1, 0
  %v836 = vsel %vm834, 1, 0
  %vm837 = vcmp.eq.s32.totalorder %v835, 1
  %vm838 = vcmp.eq.s32.totalorder %v836, 1
  %v839 = vsel %vm837, %v739, -1e+30
  %v840 = vsel %vm838, %v740, -1e+30
  %v841 = vsel %vm229, %v839, -inf
  %v842 = vsel %vm229, %v840, -inf
  %v843 = vmax.f32 %v841, %v842
  %v844 = vrot.slane %v843, 4
  %v845 = vmax.f32 %v843, %v844
  %v846 = vrot.slane %v845, 2
  %v847 = vmax.f32 %v845, %v846
  %v848 = vrot.slane %v847, 1
  %v849 = vmax.f32 %v847, %v848
  %v850 = vlaneseq
  %v851 = vshrl.u32 %v850, 7
  %v852 = vsub.s32 1, %v851
  %v853 = vrot.slane %v741, %v852
  %855 = vbcast.lane.b32.xlu0 %v853, 256
  %v856 = vpop.permute.xlu0 %855
  %s858 = sor.u32 256, 8
  %859 = vbcast.lane.b32.xlu0 %v853, %s858
  %v860 = vpop.permute.xlu0 %859
  %vm861 = vcmp.gt.f32.partialorder %v856, 0.0
  %vm862 = vcmp.gt.f32.partialorder %v860, 0.0
  %v863 = vsel %vm861, 1, 0
  %v864 = vsel %vm862, 1, 0
  %vm865 = vcmp.eq.s32.totalorder %v863, 1
  %vm866 = vcmp.eq.s32.totalorder %v864, 1
  %v867 = vsel %vm865, %v739, -1e+30
  %v868 = vsel %vm866, %v740, -1e+30
  %v869 = vsel %vm229, %v867, -inf
  %v870 = vsel %vm229, %v868, -inf
  %v871 = vmax.f32 %v869, %v870
  %v872 = vrot.slane %v871, 4
  %v873 = vmax.f32 %v871, %v872
  %v874 = vrot.slane %v873, 2
  %v875 = vmax.f32 %v873, %v874
  %v876 = vrot.slane %v875, 1
  %v877 = vmax.f32 %v875, %v876
  %v878 = vsel %vm140, %v849, %v877
  %880 = vrot.lane.b32.xlu0 %v821, 64
  %v881 = vpop.permute.xlu0 %880
  %v883 = vsel %vm229, %v878, %v881
  %884 = vst [vmem:[%s11] sm:$0x3] %v883
  // Predicated region
  $region46: #{gcn_forward.1} parent=0 // pred_check
    _
  $region47: #{gcn_forward.1} parent=0 // pred_check_branch
    %886 = sbr.rel (0) target = $region49
  $region48: #{gcn_forward.1} parent=0 // pred_region
    _
  $region49: #{gcn_forward.1} parent=0 // pred_fallthru
    _
  // Predicated region
  $region50: #{gcn_forward.1} parent=0 // pred_check
    _
  $region51: #{gcn_forward.1} parent=0 // pred_check_branch
    %888 = sbr.rel (0) target = $region53
  $region52: #{gcn_forward.1} parent=0 // pred_region
    _
  $region53: #{gcn_forward.1} parent=0 // pred_fallthru
    _

</llo_original>
